<compile_context>
chip_gen: v5e
topology: v5e:2x2
jax: 0.10.0
libtpu: 0.0.40
codegen_flags: <defaults>
</compile_context>

<pallas_src>
import functools

import numpy as np
import jax
import jax.numpy as jnp
from jax.experimental import pallas as pl
from jax.experimental.pallas import tpu as pltpu

_OUT_P = 8  # padded width of the final Linear(f3, 1); only column 0 is real


def _round_up(v, m):
    return ((v + m - 1) // m) * m


# ----------------------------------------------------------------------------
# Kernel: one grid step == `mb` ensemble members, statically unrolled.
# Whole (padded) problem fits easily in VMEM at these sizes.
# ----------------------------------------------------------------------------
def _ensemble_kernel(x_ref, w1_ref, w2_ref, w3_ref, w4_ref, b_ref, o_ref):
    mb = w1_ref.shape[0]
    f1p = w1_ref.shape[2]
    f2p = w2_ref.shape[2]
    f3p = w3_ref.shape[2]
    outp = w4_ref.shape[2]
    cdt = w1_ref.dtype                       # MXU operand dtype (f32 or bf16)

    x = x_ref[...]                           # (B, ld), pre-cast to cdt in wrapper

    for k in range(mb):                      # static unroll over members in block
        h = jnp.dot(x, w1_ref[k], preferred_element_type=jnp.float32)
        h = jnp.maximum(h + b_ref[k, 0:1, :f1p], 0.0)
        # TODO(synk): nn.Dropout(0.25/0.5) in train mode would need
        # pltpu.prng_seed / prng_random_bits masking + 1/(1-p) scaling;
        # eval-mode identity is implemented here.

        h = jnp.dot(h.astype(cdt), w2_ref[k], preferred_element_type=jnp.float32)
        h = jnp.maximum(h + b_ref[k, 1:2, :f2p], 0.0)

        h = jnp.dot(h.astype(cdt), w3_ref[k], preferred_element_type=jnp.float32)
        h = jnp.maximum(h + b_ref[k, 2:3, :f3p], 0.0)

        logits = jnp.dot(h.astype(cdt), w4_ref[k], preferred_element_type=jnp.float32)
        logits = logits + b_ref[k, 3:4, :outp]                 # (B, outp)

        # Transposed dense store (XLU transpose -> otherwise-idle slot):
        # write an (outp, B) slab; wrapper reads row 0 contiguously.
        o_ref[k] = jnp.transpose(jax.nn.sigmoid(logits)).astype(o_ref.dtype)


# ----------------------------------------------------------------------------
# Fused forward over all ensemble members (single pallas_call).
# ----------------------------------------------------------------------------
@functools.partial(jax.jit, static_argnames=("members_per_step",))
def mlp_ensemble_forward(x, stacked_params, *, members_per_step=None):
    """MLP_ensemble.forward: (B, ld) -> (B, N) probabilities, one Pallas kernel.

    members_per_step=None (default) runs the whole ensemble in a single grid step
    (best on single-TensorCore v5e/v6e).  On v7x pass members_per_step=cdiv(N, 2)
    so the "parallel" member axis shards across the two TensorCores.
    """
    W1, W2, W3, W4, Ball = stacked_params
    N = W1.shape[0]
    B, ld = x.shape
    assert W1.shape[1] == ld, (W1.shape, ld)

    mb = N if members_per_step is None else int(members_per_step)
    num_blocks = (N + mb - 1) // mb
    n_pad = num_blocks * mb
    if n_pad != N:  # pad member axis with zero members (results sliced away)
        padm = lambda a: jnp.pad(a, [(0, n_pad - N)] + [(0, 0)] * (a.ndim - 1))
        W1, W2, W3, W4, Ball = map(padm, (W1, W2, W3, W4, Ball))

    # bf16 path: cast x once here (weights were pre-cast in stack_and_pad_params),
    # so the kernel streams narrow bytes over HBM and never casts weight tiles.
    x = x.astype(W1.dtype)

    f1p, f2p, f3p, outp = W1.shape[2], W2.shape[2], W3.shape[2], W4.shape[2]
    bmax = Ball.shape[2]

    # Cost estimate from the actual (lightly padded) work, not 128-wide slabs.
    flops = 2 * n_pad * B * (ld * f1p + f1p * f2p + f2p * f3p + f3p * outp)
    bytes_accessed = sum(int(a.size) * a.dtype.itemsize
                         for a in (x, W1, W2, W3, W4, Ball))
    bytes_accessed += n_pad * outp * B * 4
    cost = pl.CostEstimate(flops=flops,
                           transcendentals=n_pad * B * outp,
                           bytes_accessed=bytes_accessed)

    out = pl.pallas_call(
        _ensemble_kernel,
        out_shape=jax.ShapeDtypeStruct((n_pad, outp, B), jnp.float32),
        grid_spec=pltpu.PrefetchScalarGridSpec(
            num_scalar_prefetch=0,
            grid=(num_blocks,),  # member-block axis (1 step by default)
            in_specs=[
                pl.BlockSpec((B, ld),         lambda g: (0, 0)),     # x (shared)
                pl.BlockSpec((mb, ld, f1p),   lambda g: (g, 0, 0)),  # W1 block
                pl.BlockSpec((mb, f1p, f2p),  lambda g: (g, 0, 0)),  # W2 block
                pl.BlockSpec((mb, f2p, f3p),  lambda g: (g, 0, 0)),  # W3 block
                pl.BlockSpec((mb, f3p, outp), lambda g: (g, 0, 0)),  # W4 block
                pl.BlockSpec((mb, 4, bmax),   lambda g: (g, 0, 0)),  # all biases (f32)
            ],
            out_specs=pl.BlockSpec((mb, outp, B), lambda g: (g, 0, 0)),
        ),
        compiler_params=pltpu.CompilerParams(
            dimension_semantics=("parallel",)),  # shards member blocks on v7x megacore
        cost_estimate=cost,
    )(x, W1, W2, W3, W4, Ball)

    return out[:N, 0, :].T  # (B, N)


# ----------------------------------------------------------------------------
# Parameter construction (PyTorch-like init), light padding & stacking.
# ----------------------------------------------------------------------------
def init_linear(key, fan_in, fan_out):
    """U(-1/sqrt(fan_in), 1/sqrt(fan_in)); weight stored transposed (in, out)."""
    kw, kb = jax.random.split(key)
    bound = 1.0 / jnp.sqrt(jnp.asarray(fan_in, jnp.float32))
    w = jax.random.uniform(kw, (fan_in, fan_out), jnp.float32, -bound, bound)
    b = jax.random.uniform(kb, (1, fan_out), jnp.float32, -bound, bound)
    return w, b


def init_mlp_ensemble(key, F1, F2, F3, ld):
    """Per-member, unpadded params (also used by the pure-JAX reference)."""
    params = []
    for f1, f2, f3 in zip(F1, F2, F3):
        key, k1, k2, k3, k4 = jax.random.split(key, 5)
        params.append((*init_linear(k1, ld, f1),
                       *init_linear(k2, f1, f2),
                       *init_linear(k3, f2, f3),
                       *init_linear(k4, f3, 1)))
    return params


def stack_and_pad_params(params, *, weights_dtype=jnp.float32):
    """Zero-pad hidden widths to shared, sublane-aligned sizes and stack members.

    Weights are cast to `weights_dtype` here (host-side) so a bf16 path streams
    half the HBM bytes; accumulation stays f32 in the kernel.  The four biases
    are concatenated into one (N, 4, bmax) f32 array (single DMA per step).
    """
    gran = 8 if np.dtype(weights_dtype).itemsize == 4 else 16
    ld = params[0][0].shape[0]
    f1p = _round_up(max(p[0].shape[1] for p in params), gran)
    f2p = _round_up(max(p[2].shape[1] for p in params), gran)
    f3p = _round_up(max(p[4].shape[1] for p in params), gran)
    outp = _OUT_P
    bmax = max(f1p, f2p, f3p, outp)

    def pad2(a, r, c, dt):
        z = jnp.zeros((r, c), dt)
        return z.at[:a.shape[0], :a.shape[1]].set(a.astype(dt))

    W1 = jnp.stack([pad2(p[0], ld, f1p, weights_dtype) for p in params])
    W2 = jnp.stack([pad2(p[2], f1p, f2p, weights_dtype) for p in params])
    W3 = jnp.stack([pad2(p[4], f2p, f3p, weights_dtype) for p in params])
    W4 = jnp.stack([pad2(p[6], f3p, outp, weights_dtype) for p in params])
    Ball = jnp.stack([
        jnp.concatenate([pad2(p[1], 1, bmax, jnp.float32),
                         pad2(p[3], 1, bmax, jnp.float32),
                         pad2(p[5], 1, bmax, jnp.float32),
                         pad2(p[7], 1, bmax, jnp.float32)], axis=0)
        for p in params])
    return (W1, W2, W3, W4, Ball)


def _reference_forward(x, params):
    """Pure-JAX reference (eval-mode dropout = identity)."""
    outs = []
    for (w1, b1, w2, b2, w3, b3, w4, b4) in params:
        h = jnp.maximum(x @ w1 + b1, 0.0)
        h = jnp.maximum(h @ w2 + b2, 0.0)
        h = jnp.maximum(h @ w3 + b3, 0.0)
        outs.append(jax.nn.sigmoid(h @ w4 + b4))
    return jnp.concatenate(outs, axis=1)


if __name__ == "__main__":
    key = jax.random.PRNGKey(0)
    kx, kp = jax.random.split(key)

    # Small, module-consistent shapes.
    B = 8          # batch
    ld = 32        # latent_dim
    F1 = [32, 48]  # per-classifier hidden sizes -> ensemble of N=2
    F2 = [32, 32]
    F3 = [16, 24]

    x = jax.random.normal(kx, (B, ld), jnp.float32)
    params = init_mlp_ensemble(kp, F1, F2, F3, ld)
    ref = _reference_forward(x, params)

    # f32 path (PyTorch float32 numerics), single grid step (v5e/v6e-friendly).
    stacked_f32 = stack_and_pad_params(params)
    out = jax.block_until_ready(mlp_ensemble_forward(x, stacked_f32))
    assert out.shape == (B, len(F1)), out.shape
    assert jnp.allclose(out, ref, atol=1e-5, rtol=1e-5), "f32 mismatch vs reference"

    # Same weights, one member per grid step (v7x megacore-sharding path).
    out_mc = jax.block_until_ready(
        mlp_ensemble_forward(x, stacked_f32, members_per_step=1))
    assert jnp.allclose(out_mc, ref, atol=1e-5, rtol=1e-5), "multi-step mismatch"

    # bf16 MXU-operand path: weights pre-cast host-side, f32 accumulation.
    stacked_bf16 = stack_and_pad_params(params, weights_dtype=jnp.bfloat16)
    out_bf16 = jax.block_until_ready(mlp_ensemble_forward(x, stacked_bf16))
    assert out_bf16.shape == (B, len(F1)), out_bf16.shape
    assert jnp.allclose(out_bf16, ref, atol=5e-2, rtol=5e-2), "bf16 mismatch vs reference"

    print("KERNEL_OK")
</pallas_src>

<mosaic_0001>
module attributes {stable_mosaic.version = 11 : i64} {
  func.func @_ensemble_kernel(%arg0: i32, %arg1: memref<8x32xf32, #tpu.memory_space<vmem>>, %arg2: memref<2x32x48xf32, #tpu.memory_space<vmem>>, %arg3: memref<2x48x32xf32, #tpu.memory_space<vmem>>, %arg4: memref<2x32x24xf32, #tpu.memory_space<vmem>>, %arg5: memref<2x24x8xf32, #tpu.memory_space<vmem>>, %arg6: memref<2x4x48xf32, #tpu.memory_space<vmem>>, %arg7: memref<2x8x8xf32, #tpu.memory_space<vmem>>) attributes {dimension_semantics = [#tpu.dimension_semantics<parallel>], iteration_bounds = array<i64: 1>, scalar_prefetch = 0 : i64, scratch_operands = 0 : i64, tpu.core_type = #tpu.core_type<tc>, window_params = [{pipeline_mode = #tpu.pipeline_mode<synchronous>, transform_indices = @transform_0, window_bounds = array<i64: 8, 32>}, {transform_indices = @transform_1, window_bounds = array<i64: 2, 32, 48>}, {transform_indices = @transform_2, window_bounds = array<i64: 2, 48, 32>}, {transform_indices = @transform_3, window_bounds = array<i64: 2, 32, 24>}, {transform_indices = @transform_4, window_bounds = array<i64: 2, 24, 8>}, {transform_indices = @transform_5, window_bounds = array<i64: 2, 4, 48>}, {transform_indices = @transform_6, window_bounds = array<i64: 2, 8, 8>}]} {
    %c0 = arith.constant 0 : index
    %c0_0 = arith.constant 0 : index
    %0 = vector.load %arg1[%c0, %c0_0] : memref<8x32xf32, #tpu.memory_space<vmem>>, vector<8x32xf32>
    %c0_1 = arith.constant 0 : index
    %c0_2 = arith.constant 0 : index
    %c0_3 = arith.constant 0 : index
    %1 = vector.load %arg2[%c0_1, %c0_2, %c0_3] : memref<2x32x48xf32, #tpu.memory_space<vmem>>, vector<1x32x48xf32>
    %2 = vector.shape_cast %1 : vector<1x32x48xf32> to vector<32x48xf32>
    %cst = arith.constant dense<0.000000e+00> : vector<8x48xf32>
    %3 = tpu.matmul %0, %2, %cst {dimension_numbers = #tpu.dot_dimension_numbers<[1], [0], [0], [1], [0, 0, 1, 1], [], []>} : vector<8x32xf32>, vector<32x48xf32>, vector<8x48xf32> -> vector<8x48xf32>
    %c0_4 = arith.constant 0 : index
    %c0_5 = arith.constant 0 : index
    %c0_6 = arith.constant 0 : index
    %4 = vector.load %arg6[%c0_4, %c0_5, %c0_6] : memref<2x4x48xf32, #tpu.memory_space<vmem>>, vector<1x1x48xf32>
    %5 = vector.shape_cast %4 : vector<1x1x48xf32> to vector<1x48xf32>
    %6 = vector.broadcast %5 : vector<1x48xf32> to vector<8x48xf32>
    %7 = arith.addf %3, %6 : vector<8x48xf32>
    %cst_7 = arith.constant 0.000000e+00 : f32
    %8 = vector.broadcast %cst_7 : f32 to vector<8x48xf32>
    %9 = arith.maximumf %7, %8 : vector<8x48xf32>
    %c0_8 = arith.constant 0 : index
    %c0_9 = arith.constant 0 : index
    %c0_10 = arith.constant 0 : index
    %10 = vector.load %arg3[%c0_8, %c0_9, %c0_10] : memref<2x48x32xf32, #tpu.memory_space<vmem>>, vector<1x48x32xf32>
    %11 = vector.shape_cast %10 : vector<1x48x32xf32> to vector<48x32xf32>
    %cst_11 = arith.constant dense<0.000000e+00> : vector<8x32xf32>
    %12 = tpu.matmul %9, %11, %cst_11 {dimension_numbers = #tpu.dot_dimension_numbers<[1], [0], [0], [1], [0, 0, 1, 1], [], []>} : vector<8x48xf32>, vector<48x32xf32>, vector<8x32xf32> -> vector<8x32xf32>
    %c0_12 = arith.constant 0 : index
    %c1 = arith.constant 1 : index
    %c0_13 = arith.constant 0 : index
    %13 = vector.load %arg6[%c0_12, %c1, %c0_13] : memref<2x4x48xf32, #tpu.memory_space<vmem>>, vector<1x1x32xf32>
    %14 = vector.shape_cast %13 : vector<1x1x32xf32> to vector<1x32xf32>
    %15 = vector.broadcast %14 : vector<1x32xf32> to vector<8x32xf32>
    %16 = arith.addf %12, %15 : vector<8x32xf32>
    %cst_14 = arith.constant 0.000000e+00 : f32
    %17 = vector.broadcast %cst_14 : f32 to vector<8x32xf32>
    %18 = arith.maximumf %16, %17 : vector<8x32xf32>
    %c0_15 = arith.constant 0 : index
    %c0_16 = arith.constant 0 : index
    %c0_17 = arith.constant 0 : index
    %19 = vector.load %arg4[%c0_15, %c0_16, %c0_17] : memref<2x32x24xf32, #tpu.memory_space<vmem>>, vector<1x32x24xf32>
    %20 = vector.shape_cast %19 : vector<1x32x24xf32> to vector<32x24xf32>
    %cst_18 = arith.constant dense<0.000000e+00> : vector<8x24xf32>
    %21 = tpu.matmul %18, %20, %cst_18 {dimension_numbers = #tpu.dot_dimension_numbers<[1], [0], [0], [1], [0, 0, 1, 1], [], []>} : vector<8x32xf32>, vector<32x24xf32>, vector<8x24xf32> -> vector<8x24xf32>
    %c0_19 = arith.constant 0 : index
    %c2 = arith.constant 2 : index
    %c0_20 = arith.constant 0 : index
    %22 = vector.load %arg6[%c0_19, %c2, %c0_20] : memref<2x4x48xf32, #tpu.memory_space<vmem>>, vector<1x1x24xf32>
    %23 = vector.shape_cast %22 : vector<1x1x24xf32> to vector<1x24xf32>
    %24 = vector.broadcast %23 : vector<1x24xf32> to vector<8x24xf32>
    %25 = arith.addf %21, %24 : vector<8x24xf32>
    %cst_21 = arith.constant 0.000000e+00 : f32
    %26 = vector.broadcast %cst_21 : f32 to vector<8x24xf32>
    %27 = arith.maximumf %25, %26 : vector<8x24xf32>
    %c0_22 = arith.constant 0 : index
    %c0_23 = arith.constant 0 : index
    %c0_24 = arith.constant 0 : index
    %28 = vector.load %arg5[%c0_22, %c0_23, %c0_24] : memref<2x24x8xf32, #tpu.memory_space<vmem>>, vector<1x24x8xf32>
    %29 = vector.shape_cast %28 : vector<1x24x8xf32> to vector<24x8xf32>
    %cst_25 = arith.constant dense<0.000000e+00> : vector<8x8xf32>
    %30 = tpu.matmul %27, %29, %cst_25 {dimension_numbers = #tpu.dot_dimension_numbers<[1], [0], [0], [1], [0, 0, 1, 1], [], []>} : vector<8x24xf32>, vector<24x8xf32>, vector<8x8xf32> -> vector<8x8xf32>
    %c0_26 = arith.constant 0 : index
    %c3 = arith.constant 3 : index
    %c0_27 = arith.constant 0 : index
    %31 = vector.load %arg6[%c0_26, %c3, %c0_27] : memref<2x4x48xf32, #tpu.memory_space<vmem>>, vector<1x1x8xf32>
    %32 = vector.shape_cast %31 : vector<1x1x8xf32> to vector<1x8xf32>
    %33 = vector.broadcast %32 : vector<1x8xf32> to vector<8x8xf32>
    %34 = arith.addf %30, %33 : vector<8x8xf32>
    %35 = arith.negf %34 : vector<8x8xf32>
    %36 = math.exp %35 : vector<8x8xf32>
    %cst_28 = arith.constant 1.000000e+00 : f32
    %37 = vector.broadcast %cst_28 : f32 to vector<8x8xf32>
    %38 = arith.addf %37, %36 : vector<8x8xf32>
    %39 = arith.divf %37, %38 : vector<8x8xf32>
    %40 = tpu.transpose %39, [1, 0] : vector<8x8xf32> -> vector<8x8xf32>
    %c0_29 = arith.constant 0 : index
    %c0_30 = arith.constant 0 : index
    %c0_31 = arith.constant 0 : index
    %41 = vector.load %arg7[%c0_29, %c0_30, %c0_31] : memref<2x8x8xf32, #tpu.memory_space<vmem>>, vector<1x8x8xf32>
    %42 = vector.shape_cast %41 : vector<1x8x8xf32> to vector<8x8xf32>
    %43 = vector.shape_cast %40 : vector<8x8xf32> to vector<1x8x8xf32>
    tpu.vector_store %arg7[%c0_29, %c0_30, %c0_31], %43 {strides = array<i32>} : memref<2x8x8xf32, #tpu.memory_space<vmem>>, vector<1x8x8xf32>,
    %c1_32 = arith.constant 1 : index
    %c0_33 = arith.constant 0 : index
    %c0_34 = arith.constant 0 : index
    %44 = vector.load %arg2[%c1_32, %c0_33, %c0_34] : memref<2x32x48xf32, #tpu.memory_space<vmem>>, vector<1x32x48xf32>
    %45 = vector.shape_cast %44 : vector<1x32x48xf32> to vector<32x48xf32>
    %cst_35 = arith.constant dense<0.000000e+00> : vector<8x48xf32>
    %46 = tpu.matmul %0, %45, %cst_35 {dimension_numbers = #tpu.dot_dimension_numbers<[1], [0], [0], [1], [0, 0, 1, 1], [], []>} : vector<8x32xf32>, vector<32x48xf32>, vector<8x48xf32> -> vector<8x48xf32>
    %c1_36 = arith.constant 1 : index
    %c0_37 = arith.constant 0 : index
    %c0_38 = arith.constant 0 : index
    %47 = vector.load %arg6[%c1_36, %c0_37, %c0_38] : memref<2x4x48xf32, #tpu.memory_space<vmem>>, vector<1x1x48xf32>
    %48 = vector.shape_cast %47 : vector<1x1x48xf32> to vector<1x48xf32>
    %49 = vector.broadcast %48 : vector<1x48xf32> to vector<8x48xf32>
    %50 = arith.addf %46, %49 : vector<8x48xf32>
    %cst_39 = arith.constant 0.000000e+00 : f32
    %51 = vector.broadcast %cst_39 : f32 to vector<8x48xf32>
    %52 = arith.maximumf %50, %51 : vector<8x48xf32>
    %c1_40 = arith.constant 1 : index
    %c0_41 = arith.constant 0 : index
    %c0_42 = arith.constant 0 : index
    %53 = vector.load %arg3[%c1_40, %c0_41, %c0_42] : memref<2x48x32xf32, #tpu.memory_space<vmem>>, vector<1x48x32xf32>
    %54 = vector.shape_cast %53 : vector<1x48x32xf32> to vector<48x32xf32>
    %cst_43 = arith.constant dense<0.000000e+00> : vector<8x32xf32>
    %55 = tpu.matmul %52, %54, %cst_43 {dimension_numbers = #tpu.dot_dimension_numbers<[1], [0], [0], [1], [0, 0, 1, 1], [], []>} : vector<8x48xf32>, vector<48x32xf32>, vector<8x32xf32> -> vector<8x32xf32>
    %c1_44 = arith.constant 1 : index
    %c1_45 = arith.constant 1 : index
    %c0_46 = arith.constant 0 : index
    %56 = vector.load %arg6[%c1_44, %c1_45, %c0_46] : memref<2x4x48xf32, #tpu.memory_space<vmem>>, vector<1x1x32xf32>
    %57 = vector.shape_cast %56 : vector<1x1x32xf32> to vector<1x32xf32>
    %58 = vector.broadcast %57 : vector<1x32xf32> to vector<8x32xf32>
    %59 = arith.addf %55, %58 : vector<8x32xf32>
    %cst_47 = arith.constant 0.000000e+00 : f32
    %60 = vector.broadcast %cst_47 : f32 to vector<8x32xf32>
    %61 = arith.maximumf %59, %60 : vector<8x32xf32>
    %c1_48 = arith.constant 1 : index
    %c0_49 = arith.constant 0 : index
    %c0_50 = arith.constant 0 : index
    %62 = vector.load %arg4[%c1_48, %c0_49, %c0_50] : memref<2x32x24xf32, #tpu.memory_space<vmem>>, vector<1x32x24xf32>
    %63 = vector.shape_cast %62 : vector<1x32x24xf32> to vector<32x24xf32>
    %cst_51 = arith.constant dense<0.000000e+00> : vector<8x24xf32>
    %64 = tpu.matmul %61, %63, %cst_51 {dimension_numbers = #tpu.dot_dimension_numbers<[1], [0], [0], [1], [0, 0, 1, 1], [], []>} : vector<8x32xf32>, vector<32x24xf32>, vector<8x24xf32> -> vector<8x24xf32>
    %c1_52 = arith.constant 1 : index
    %c2_53 = arith.constant 2 : index
    %c0_54 = arith.constant 0 : index
    %65 = vector.load %arg6[%c1_52, %c2_53, %c0_54] : memref<2x4x48xf32, #tpu.memory_space<vmem>>, vector<1x1x24xf32>
    %66 = vector.shape_cast %65 : vector<1x1x24xf32> to vector<1x24xf32>
    %67 = vector.broadcast %66 : vector<1x24xf32> to vector<8x24xf32>
    %68 = arith.addf %64, %67 : vector<8x24xf32>
    %cst_55 = arith.constant 0.000000e+00 : f32
    %69 = vector.broadcast %cst_55 : f32 to vector<8x24xf32>
    %70 = arith.maximumf %68, %69 : vector<8x24xf32>
    %c1_56 = arith.constant 1 : index
    %c0_57 = arith.constant 0 : index
    %c0_58 = arith.constant 0 : index
    %71 = vector.load %arg5[%c1_56, %c0_57, %c0_58] : memref<2x24x8xf32, #tpu.memory_space<vmem>>, vector<1x24x8xf32>
    %72 = vector.shape_cast %71 : vector<1x24x8xf32> to vector<24x8xf32>
    %cst_59 = arith.constant dense<0.000000e+00> : vector<8x8xf32>
    %73 = tpu.matmul %70, %72, %cst_59 {dimension_numbers = #tpu.dot_dimension_numbers<[1], [0], [0], [1], [0, 0, 1, 1], [], []>} : vector<8x24xf32>, vector<24x8xf32>, vector<8x8xf32> -> vector<8x8xf32>
    %c1_60 = arith.constant 1 : index
    %c3_61 = arith.constant 3 : index
    %c0_62 = arith.constant 0 : index
    %74 = vector.load %arg6[%c1_60, %c3_61, %c0_62] : memref<2x4x48xf32, #tpu.memory_space<vmem>>, vector<1x1x8xf32>
    %75 = vector.shape_cast %74 : vector<1x1x8xf32> to vector<1x8xf32>
    %76 = vector.broadcast %75 : vector<1x8xf32> to vector<8x8xf32>
    %77 = arith.addf %73, %76 : vector<8x8xf32>
    %78 = arith.negf %77 : vector<8x8xf32>
    %79 = math.exp %78 : vector<8x8xf32>
    %cst_63 = arith.constant 1.000000e+00 : f32
    %80 = vector.broadcast %cst_63 : f32 to vector<8x8xf32>
    %81 = arith.addf %80, %79 : vector<8x8xf32>
    %82 = arith.divf %80, %81 : vector<8x8xf32>
    %83 = tpu.transpose %82, [1, 0] : vector<8x8xf32> -> vector<8x8xf32>
    %c1_64 = arith.constant 1 : index
    %c0_65 = arith.constant 0 : index
    %c0_66 = arith.constant 0 : index
    %84 = vector.load %arg7[%c1_64, %c0_65, %c0_66] : memref<2x8x8xf32, #tpu.memory_space<vmem>>, vector<1x8x8xf32>
    %85 = vector.shape_cast %84 : vector<1x8x8xf32> to vector<8x8xf32>
    %86 = vector.shape_cast %83 : vector<8x8xf32> to vector<1x8x8xf32>
    tpu.vector_store %arg7[%c1_64, %c0_65, %c0_66], %86 {strides = array<i32>} : memref<2x8x8xf32, #tpu.memory_space<vmem>>, vector<1x8x8xf32>,
    return
  }
  func.func @transform_0(%arg0: i32) -> (i32, i32) {
    %c0_i32 = arith.constant 0 : i32
    %c0_i32_0 = arith.constant 0 : i32
    %c0_i32_1 = arith.constant 0 : i32
    return %c0_i32, %c0_i32_0 : i32, i32
  }
  func.func @transform_1(%arg0: i32) -> (i32, i32, i32) {
    %c0_i32 = arith.constant 0 : i32
    %c0_i32_0 = arith.constant 0 : i32
    %c0_i32_1 = arith.constant 0 : i32
    return %arg0, %c0_i32, %c0_i32_0 : i32, i32, i32
  }
  func.func @transform_2(%arg0: i32) -> (i32, i32, i32) {
    %c0_i32 = arith.constant 0 : i32
    %c0_i32_0 = arith.constant 0 : i32
    %c0_i32_1 = arith.constant 0 : i32
    return %arg0, %c0_i32, %c0_i32_0 : i32, i32, i32
  }
  func.func @transform_3(%arg0: i32) -> (i32, i32, i32) {
    %c0_i32 = arith.constant 0 : i32
    %c0_i32_0 = arith.constant 0 : i32
    %c0_i32_1 = arith.constant 0 : i32
    return %arg0, %c0_i32, %c0_i32_0 : i32, i32, i32
  }
  func.func @transform_4(%arg0: i32) -> (i32, i32, i32) {
    %c0_i32 = arith.constant 0 : i32
    %c0_i32_0 = arith.constant 0 : i32
    %c0_i32_1 = arith.constant 0 : i32
    return %arg0, %c0_i32, %c0_i32_0 : i32, i32, i32
  }
  func.func @transform_5(%arg0: i32) -> (i32, i32, i32) {
    %c0_i32 = arith.constant 0 : i32
    %c0_i32_0 = arith.constant 0 : i32
    %c0_i32_1 = arith.constant 0 : i32
    return %arg0, %c0_i32, %c0_i32_0 : i32, i32, i32
  }
  func.func @transform_6(%arg0: i32) -> (i32, i32, i32) {
    %c0_i32 = arith.constant 0 : i32
    %c0_i32_0 = arith.constant 0 : i32
    %c0_i32_1 = arith.constant 0 : i32
    return %arg0, %c0_i32, %c0_i32_0 : i32, i32, i32
  }
}

</mosaic_0001>

<llo_original>
// kernel: mlp_ensemble_forward.1
$region0: #{mlp_ensemble_forward.1}
  #allocation0 [shape = 'u32[]', space=smem, size = 0x4, offset = 0x4, fixed_abs, tag = 'smem constant byte address 0x4 - core index']
  #allocation1 [shape = 'u32[72,128]{1,0:T(1,128)}', space=vmem, size = 0x9000, scoped, tag = 'internal scratch']
  %s0 = inlined_call_operand.vmem [shape: f32[8,32], index: 0, kind: input, shape index: {}]
  %s1 = inlined_call_operand.vmem [shape: f32[2,32,48], index: 1, kind: input, shape index: {}]
  %s2 = inlined_call_operand.vmem [shape: f32[2,48,32], index: 2, kind: input, shape index: {}]
  %s3 = inlined_call_operand.vmem [shape: f32[2,32,24], index: 3, kind: input, shape index: {}]
  %s4 = inlined_call_operand.vmem [shape: f32[2,24,8], index: 4, kind: input, shape index: {}]
  %s5 = inlined_call_operand.vmem [shape: f32[2,4,48], index: 5, kind: input, shape index: {}]
  %s6 = inlined_call_operand.vmem [shape: f32[2,8,8], index: 6, kind: output, shape index: {}]
  %s7 = sld [smem:[#allocation0]]
  $region34: #{mlp_ensemble_forward.1} parent=0
    _
  %s9 = ssub.s32 1, %s7
  %s10 = scalar_select 0, %s9, %s7
  // Predicated region
  $region2: #{mlp_ensemble_forward.1} parent=0 // pred_check
    _
  $region3: #{mlp_ensemble_forward.1} parent=0 // pred_check_branch
    %12 = sbr.rel (0) target = $region5
  $region4: #{mlp_ensemble_forward.1} parent=0 // pred_region
    _
  $region5: #{mlp_ensemble_forward.1} parent=0 // pred_fallthru
    _
  // Predicated region
  $region6: #{mlp_ensemble_forward.1} parent=0 // pred_check
    _
  $region7: #{mlp_ensemble_forward.1} parent=0 // pred_check_branch
    %14 = sbr.rel (0) target = $region9
  $region8: #{mlp_ensemble_forward.1} parent=0 // pred_region
    _
  $region9: #{mlp_ensemble_forward.1} parent=0 // pred_fallthru
    _
  // Predicated region
  $region10: #{mlp_ensemble_forward.1} parent=0 // pred_check
    _
  $region11: #{mlp_ensemble_forward.1} parent=0 // pred_check_branch
    %16 = sbr.rel (0) target = $region13
  $region12: #{mlp_ensemble_forward.1} parent=0 // pred_region
    _
  $region13: #{mlp_ensemble_forward.1} parent=0 // pred_fallthru
    _
  // Predicated region
  $region14: #{mlp_ensemble_forward.1} parent=0 // pred_check
    _
  $region15: #{mlp_ensemble_forward.1} parent=0 // pred_check_branch
    %18 = sbr.rel (0) target = $region17
  $region16: #{mlp_ensemble_forward.1} parent=0 // pred_region
    _
  $region17: #{mlp_ensemble_forward.1} parent=0 // pred_fallthru
    _
  // Predicated region
  $region18: #{mlp_ensemble_forward.1} parent=0 // pred_check
    _
  $region19: #{mlp_ensemble_forward.1} parent=0 // pred_check_branch
    %20 = sbr.rel (0) target = $region21
  $region20: #{mlp_ensemble_forward.1} parent=0 // pred_region
    _
  $region21: #{mlp_ensemble_forward.1} parent=0 // pred_fallthru
    _
  // Predicated region
  $region22: #{mlp_ensemble_forward.1} parent=0 // pred_check
    _
  $region23: #{mlp_ensemble_forward.1} parent=0 // pred_check_branch
    %22 = sbr.rel (0) target = $region25
  $region24: #{mlp_ensemble_forward.1} parent=0 // pred_region
    _
  $region25: #{mlp_ensemble_forward.1} parent=0 // pred_fallthru
    _
  %v23 = vld [vmem:[%s0] sm:$0xff]
  %v24 = vld [vmem:[%s1] sm:$0xff]
  %v25 = vld [vmem:[%s1 + $0x8] sm:$0xff]
  %v26 = vld [vmem:[%s1 + $0x10] sm:$0xff]
  %v27 = vld [vmem:[%s1 + $0x18] sm:$0xff]
  %v28 = vld [vmem:[%s5] sm:$0x1]
  %v29 = vperm.slane %v28, 0
  %vm30 = vcmask 261120
  %v32 = vsel %vm30, %v23, 0
  %34 = vmatpush.msra.mxu0 0.0
  %35 = vmatpush.msra.mxu0 0.0
  %36 = vmatpush.msra.mxu0 0.0
  %37 = vmatpush.msra.mxu0 0.0
  %38 = vmatpush.msra.mxu0 0.0
  %39 = vmatpush.msra.mxu0 0.0
  %40 = vmatpush.msra.mxu0 0.0
  %41 = vmatpush.msra.mxu0 0.0
  %42 = vmatpush.msra.mxu0 0.0
  %43 = vmatpush.msra.mxu0 0.0
  %44 = vmatpush.msra.mxu0 0.0
  %45 = vmatpush.msra.mxu0 0.0
  %46 = vmatpush.msra.mxu0 %v27
  %47 = vmatpush.msra.mxu0 %v26
  %48 = vmatpush.msra.mxu0 %v25
  %49 = vmatpush.msra.mxu0 %v24
  %50 = vmatmul.f32.gmra.mxu0 %v32
  %v51 = vpop.f32.mrf.mxu0
  %v52 = vadd.f32 %v29, %v51
  %53 = vdwg.mxu0
  %v54 = vmax.f32 %v52, 0.0
  %v55 = vld [vmem:[%s2] sm:$0xff]
  %v56 = vld [vmem:[%s2 + $0x8] sm:$0xff]
  %v57 = vld [vmem:[%s2 + $0x10] sm:$0xff]
  %v58 = vld [vmem:[%s2 + $0x18] sm:$0xff]
  %v59 = vld [vmem:[%s2 + $0x20] sm:$0xff]
  %v60 = vld [vmem:[%s2 + $0x28] sm:$0xff]
  %v61 = vld [vmem:[%s5 + $0x1] sm:$0x1]
  %v62 = vperm.slane %v61, 0
  %vm63 = vcmask 392192
  %v65 = vsel %vm63, %v54, 0
  %67 = vmatpush.msra.mxu0 0.0
  %68 = vmatpush.msra.mxu0 0.0
  %69 = vmatpush.msra.mxu0 0.0
  %70 = vmatpush.msra.mxu0 0.0
  %71 = vmatpush.msra.mxu0 0.0
  %72 = vmatpush.msra.mxu0 0.0
  %73 = vmatpush.msra.mxu0 0.0
  %74 = vmatpush.msra.mxu0 0.0
  %75 = vmatpush.msra.mxu0 0.0
  %76 = vmatpush.msra.mxu0 0.0
  %77 = vmatpush.msra.mxu0 %v60
  %78 = vmatpush.msra.mxu0 %v59
  %79 = vmatpush.msra.mxu0 %v58
  %80 = vmatpush.msra.mxu0 %v57
  %81 = vmatpush.msra.mxu0 %v56
  %82 = vmatpush.msra.mxu0 %v55
  %83 = vmatmul.f32.gmra.mxu0 %v65
  %v84 = vpop.f32.mrf.mxu0
  %v85 = vadd.f32 %v62, %v84
  %86 = vdwg.mxu0
  %v87 = vmax.f32 %v85, 0.0
  %v88 = vld [vmem:[%s3] sm:$0xff]
  %v89 = vld [vmem:[%s3 + $0x8] sm:$0xff]
  %v90 = vld [vmem:[%s3 + $0x10] sm:$0xff]
  %v91 = vld [vmem:[%s3 + $0x18] sm:$0xff]
  %v92 = vld [vmem:[%s5 + $0x2] sm:$0x1]
  %v93 = vperm.slane %v92, 0
  %v95 = vsel %vm30, %v87, 0
  %97 = vmatpush.msra.mxu0 0.0
  %98 = vmatpush.msra.mxu0 0.0
  %99 = vmatpush.msra.mxu0 0.0
  %100 = vmatpush.msra.mxu0 0.0
  %101 = vmatpush.msra.mxu0 0.0
  %102 = vmatpush.msra.mxu0 0.0
  %103 = vmatpush.msra.mxu0 0.0
  %104 = vmatpush.msra.mxu0 0.0
  %105 = vmatpush.msra.mxu0 0.0
  %106 = vmatpush.msra.mxu0 0.0
  %107 = vmatpush.msra.mxu0 0.0
  %108 = vmatpush.msra.mxu0 0.0
  %109 = vmatpush.msra.mxu0 %v91
  %110 = vmatpush.msra.mxu0 %v90
  %111 = vmatpush.msra.mxu0 %v89
  %112 = vmatpush.msra.mxu0 %v88
  %113 = vmatmul.f32.gmra.mxu0 %v95
  %v114 = vpop.f32.mrf.mxu0
  %v115 = vadd.f32 %v93, %v114
  %116 = vdwg.mxu0
  %v117 = vmax.f32 %v115, 0.0
  %v118 = vld [vmem:[%s4] sm:$0xff]
  %v119 = vld [vmem:[%s4 + $0x8] sm:$0xff]
  %v120 = vld [vmem:[%s4 + $0x10] sm:$0xff]
  %v121 = vld [vmem:[%s5 + $0x3] sm:$0x1]
  %v122 = vperm.slane %v121, 0
  %vm123 = vcmask 195584
  %v125 = vsel %vm123, %v117, 0
  %127 = vmatpush.msra.mxu0 0.0
  %128 = vmatpush.msra.mxu0 0.0
  %129 = vmatpush.msra.mxu0 0.0
  %130 = vmatpush.msra.mxu0 0.0
  %131 = vmatpush.msra.mxu0 0.0
  %132 = vmatpush.msra.mxu0 0.0
  %133 = vmatpush.msra.mxu0 0.0
  %134 = vmatpush.msra.mxu0 0.0
  %135 = vmatpush.msra.mxu0 0.0
  %136 = vmatpush.msra.mxu0 0.0
  %137 = vmatpush.msra.mxu0 0.0
  %138 = vmatpush.msra.mxu0 0.0
  %139 = vmatpush.msra.mxu0 0.0
  %140 = vmatpush.msra.mxu0 %v120
  %141 = vmatpush.msra.mxu0 %v119
  %142 = vmatpush.msra.mxu0 %v118
  %143 = vmatmul.f32.gmra.mxu0 %v125
  %v144 = vpop.f32.mrf.mxu0
  %v145 = vadd.f32 %v122, %v144
  %146 = vdwg.mxu0
  %v147 = vxor.u32 %v145, 2147483648
  %v148 = vmul.f32 %v147, 1.442695
  %v149 = vpow.pop %v148
  %v150 = vadd.f32 %v149, 1.0
  %v151 = vrcp.pop %v150
  %v152 = vmul.f32 %v150, %v151
  %v153 = vsub.f32 1.0, %v152
  %v154 = vmul.f32 %v151, %v153
  %v155 = vadd.f32 %v151, %v154
  %vm156 = vweird.f32 %v150
  %vm157 = vweird.f32 %v151
  %vm158 = vmor %vm156, %vm157
  %v159 = vsel %vm158, %v151, %v155
  %v160 = vand.u32 2147483647, %v150
  %vm161 = vcmp.eq.f32.partialorder %v160, 8.507059e+37
  %v162 = vand.u32 %v150, 2147483648
  %v163 = vor.u32 1.1754944e-38, %v162
  %v164 = vsel %vm161, %v163, %v159
  %v165 = vmul.f32 1.0, %v164
  %166 = vxpose.xlu0.b32.start [1/16] %v165, 128
  %167 = vxpose.xlu0.b32.cont [2/16] 0.0, 128
  %168 = vxpose.xlu0.b32.cont [3/16] 0.0, 128
  %169 = vxpose.xlu0.b32.cont [4/16] 0.0, 128
  %170 = vxpose.xlu0.b32.cont [5/16] 0.0, 128
  %171 = vxpose.xlu0.b32.cont [6/16] 0.0, 128
  %172 = vxpose.xlu0.b32.cont [7/16] 0.0, 128
  %173 = vxpose.xlu0.b32.cont [8/16] 0.0, 128
  %174 = vxpose.xlu0.b32.cont [9/16] 0.0, 128
  %175 = vxpose.xlu0.b32.cont [10/16] 0.0, 128
  %176 = vxpose.xlu0.b32.cont [11/16] 0.0, 128
  %177 = vxpose.xlu0.b32.cont [12/16] 0.0, 128
  %178 = vxpose.xlu0.b32.cont [13/16] 0.0, 128
  %179 = vxpose.xlu0.b32.cont [14/16] 0.0, 128
  %180 = vxpose.xlu0.b32.cont [15/16] 0.0, 128
  %181 = vxpose.xlu0.b32.end [16/16] 0.0, 128
  %v182 = vpop.trf.xlu0
  %v183 = vpop.trf.xlu0
  %v184 = vpop.trf.xlu0
  %v185 = vpop.trf.xlu0
  %v186 = vpop.trf.xlu0
  %v187 = vpop.trf.xlu0
  %v188 = vpop.trf.xlu0
  %v189 = vpop.trf.xlu0
  %v190 = vpop.trf.xlu0
  %v191 = vpop.trf.xlu0
  %v192 = vpop.trf.xlu0
  %v193 = vpop.trf.xlu0
  %v194 = vpop.trf.xlu0
  %v195 = vpop.trf.xlu0
  %v196 = vpop.trf.xlu0
  %v197 = vpop.trf.xlu0
  %vm198 = vcmask 64512
  %199 = vst.msk [vmem:[%s6] sm:$0xff] %vm198, %v182
  %s200 = scalar_lea.vmem %s1, 32
  %v201 = vld [vmem:[%s200] sm:$0xff]
  %v202 = vld [vmem:[%s200 + $0x8] sm:$0xff]
  %v203 = vld [vmem:[%s200 + $0x10] sm:$0xff]
  %v204 = vld [vmem:[%s200 + $0x18] sm:$0xff]
  %s205 = scalar_lea.vmem %s5, 4
  %v206 = vld [vmem:[%s205] sm:$0x1]
  %v207 = vperm.slane %v206, 0
  %208 = vmatpush.msra.mxu0 0.0
  %209 = vmatpush.msra.mxu0 0.0
  %210 = vmatpush.msra.mxu0 0.0
  %211 = vmatpush.msra.mxu0 0.0
  %212 = vmatpush.msra.mxu0 0.0
  %213 = vmatpush.msra.mxu0 0.0
  %214 = vmatpush.msra.mxu0 0.0
  %215 = vmatpush.msra.mxu0 0.0
  %216 = vmatpush.msra.mxu0 0.0
  %217 = vmatpush.msra.mxu0 0.0
  %218 = vmatpush.msra.mxu0 0.0
  %219 = vmatpush.msra.mxu0 0.0
  %220 = vmatpush.msra.mxu0 %v204
  %221 = vmatpush.msra.mxu0 %v203
  %222 = vmatpush.msra.mxu0 %v202
  %223 = vmatpush.msra.mxu0 %v201
  %224 = vmatmul.f32.gmra.mxu0 %v32
  %v225 = vpop.f32.mrf.mxu0
  %v226 = vadd.f32 %v207, %v225
  %227 = vdwg.mxu0
  %v228 = vmax.f32 %v226, 0.0
  %s229 = scalar_lea.vmem %s2, 48
  %v230 = vld [vmem:[%s229] sm:$0xff]
  %v231 = vld [vmem:[%s229 + $0x8] sm:$0xff]
  %v232 = vld [vmem:[%s229 + $0x10] sm:$0xff]
  %v233 = vld [vmem:[%s229 + $0x18] sm:$0xff]
  %v234 = vld [vmem:[%s229 + $0x20] sm:$0xff]
  %v235 = vld [vmem:[%s229 + $0x28] sm:$0xff]
  %v236 = vld [vmem:[%s205 + $0x1] sm:$0x1]
  %v237 = vperm.slane %v236, 0
  %v239 = vsel %vm63, %v228, 0
  %241 = vmatpush.msra.mxu0 0.0
  %242 = vmatpush.msra.mxu0 0.0
  %243 = vmatpush.msra.mxu0 0.0
  %244 = vmatpush.msra.mxu0 0.0
  %245 = vmatpush.msra.mxu0 0.0
  %246 = vmatpush.msra.mxu0 0.0
  %247 = vmatpush.msra.mxu0 0.0
  %248 = vmatpush.msra.mxu0 0.0
  %249 = vmatpush.msra.mxu0 0.0
  %250 = vmatpush.msra.mxu0 0.0
  %251 = vmatpush.msra.mxu0 %v235
  %252 = vmatpush.msra.mxu0 %v234
  %253 = vmatpush.msra.mxu0 %v233
  %254 = vmatpush.msra.mxu0 %v232
  %255 = vmatpush.msra.mxu0 %v231
  %256 = vmatpush.msra.mxu0 %v230
  %257 = vmatmul.f32.gmra.mxu0 %v239
  %v258 = vpop.f32.mrf.mxu0
  %v259 = vadd.f32 %v237, %v258
  %260 = vdwg.mxu0
  %v261 = vmax.f32 %v259, 0.0
  %s262 = scalar_lea.vmem %s3, 32
  %v263 = vld [vmem:[%s262] sm:$0xff]
  %v264 = vld [vmem:[%s262 + $0x8] sm:$0xff]
  %v265 = vld [vmem:[%s262 + $0x10] sm:$0xff]
  %v266 = vld [vmem:[%s262 + $0x18] sm:$0xff]
  %v267 = vld [vmem:[%s205 + $0x2] sm:$0x1]
  %v268 = vperm.slane %v267, 0
  %v270 = vsel %vm30, %v261, 0
  %272 = vmatpush.msra.mxu0 0.0
  %273 = vmatpush.msra.mxu0 0.0
  %274 = vmatpush.msra.mxu0 0.0
  %275 = vmatpush.msra.mxu0 0.0
  %276 = vmatpush.msra.mxu0 0.0
  %277 = vmatpush.msra.mxu0 0.0
  %278 = vmatpush.msra.mxu0 0.0
  %279 = vmatpush.msra.mxu0 0.0
  %280 = vmatpush.msra.mxu0 0.0
  %281 = vmatpush.msra.mxu0 0.0
  %282 = vmatpush.msra.mxu0 0.0
  %283 = vmatpush.msra.mxu0 0.0
  %284 = vmatpush.msra.mxu0 %v266
  %285 = vmatpush.msra.mxu0 %v265
  %286 = vmatpush.msra.mxu0 %v264
  %287 = vmatpush.msra.mxu0 %v263
  %288 = vmatmul.f32.gmra.mxu0 %v270
  %v289 = vpop.f32.mrf.mxu0
  %v290 = vadd.f32 %v268, %v289
  %291 = vdwg.mxu0
  %v292 = vmax.f32 %v290, 0.0
  %s293 = scalar_lea.vmem %s4, 24
  %v294 = vld [vmem:[%s293] sm:$0xff]
  %v295 = vld [vmem:[%s293 + $0x8] sm:$0xff]
  %v296 = vld [vmem:[%s293 + $0x10] sm:$0xff]
  %v297 = vld [vmem:[%s205 + $0x3] sm:$0x1]
  %v298 = vperm.slane %v297, 0
  %v300 = vsel %vm123, %v292, 0
  %302 = vmatpush.msra.mxu0 0.0
  %303 = vmatpush.msra.mxu0 0.0
  %304 = vmatpush.msra.mxu0 0.0
  %305 = vmatpush.msra.mxu0 0.0
  %306 = vmatpush.msra.mxu0 0.0
  %307 = vmatpush.msra.mxu0 0.0
  %308 = vmatpush.msra.mxu0 0.0
  %309 = vmatpush.msra.mxu0 0.0
  %310 = vmatpush.msra.mxu0 0.0
  %311 = vmatpush.msra.mxu0 0.0
  %312 = vmatpush.msra.mxu0 0.0
  %313 = vmatpush.msra.mxu0 0.0
  %314 = vmatpush.msra.mxu0 0.0
  %315 = vmatpush.msra.mxu0 %v296
  %316 = vmatpush.msra.mxu0 %v295
  %317 = vmatpush.msra.mxu0 %v294
  %318 = vmatmul.f32.gmra.mxu0 %v300
  %v319 = vpop.f32.mrf.mxu0
  %v320 = vadd.f32 %v298, %v319
  %321 = vdwg.mxu0
  %v322 = vxor.u32 %v320, 2147483648
  %v323 = vmul.f32 %v322, 1.442695
  %v324 = vpow.pop %v323
  %v325 = vadd.f32 %v324, 1.0
  %v326 = vrcp.pop %v325
  %v327 = vmul.f32 %v325, %v326
  %v328 = vsub.f32 1.0, %v327
  %v329 = vmul.f32 %v326, %v328
  %v330 = vadd.f32 %v326, %v329
  %vm331 = vweird.f32 %v325
  %vm332 = vweird.f32 %v326
  %vm333 = vmor %vm331, %vm332
  %v334 = vsel %vm333, %v326, %v330
  %v335 = vand.u32 2147483647, %v325
  %vm336 = vcmp.eq.f32.partialorder %v335, 8.507059e+37
  %v337 = vand.u32 %v325, 2147483648
  %v338 = vor.u32 1.1754944e-38, %v337
  %v339 = vsel %vm336, %v338, %v334
  %v340 = vmul.f32 1.0, %v339
  %341 = vxpose.xlu0.b32.start [1/16] %v340, 128
  %342 = vxpose.xlu0.b32.cont [2/16] 0.0, 128
  %343 = vxpose.xlu0.b32.cont [3/16] 0.0, 128
  %344 = vxpose.xlu0.b32.cont [4/16] 0.0, 128
  %345 = vxpose.xlu0.b32.cont [5/16] 0.0, 128
  %346 = vxpose.xlu0.b32.cont [6/16] 0.0, 128
  %347 = vxpose.xlu0.b32.cont [7/16] 0.0, 128
  %348 = vxpose.xlu0.b32.cont [8/16] 0.0, 128
  %349 = vxpose.xlu0.b32.cont [9/16] 0.0, 128
  %350 = vxpose.xlu0.b32.cont [10/16] 0.0, 128
  %351 = vxpose.xlu0.b32.cont [11/16] 0.0, 128
  %352 = vxpose.xlu0.b32.cont [12/16] 0.0, 128
  %353 = vxpose.xlu0.b32.cont [13/16] 0.0, 128
  %354 = vxpose.xlu0.b32.cont [14/16] 0.0, 128
  %355 = vxpose.xlu0.b32.cont [15/16] 0.0, 128
  %356 = vxpose.xlu0.b32.end [16/16] 0.0, 128
  %v357 = vpop.trf.xlu0
  %v358 = vpop.trf.xlu0
  %v359 = vpop.trf.xlu0
  %v360 = vpop.trf.xlu0
  %v361 = vpop.trf.xlu0
  %v362 = vpop.trf.xlu0
  %v363 = vpop.trf.xlu0
  %v364 = vpop.trf.xlu0
  %v365 = vpop.trf.xlu0
  %v366 = vpop.trf.xlu0
  %v367 = vpop.trf.xlu0
  %v368 = vpop.trf.xlu0
  %v369 = vpop.trf.xlu0
  %v370 = vpop.trf.xlu0
  %v371 = vpop.trf.xlu0
  %v372 = vpop.trf.xlu0
  %s373 = scalar_lea.vmem %s6, 8
  %374 = vst.msk [vmem:[%s373] sm:$0xff] %vm198, %v357
  // Predicated region
  $region26: #{mlp_ensemble_forward.1} parent=0 // pred_check
    _
  $region27: #{mlp_ensemble_forward.1} parent=0 // pred_check_branch
    %376 = sbr.rel (0) target = $region29
  $region28: #{mlp_ensemble_forward.1} parent=0 // pred_region
    _
  $region29: #{mlp_ensemble_forward.1} parent=0 // pred_fallthru
    _
  // Predicated region
  $region30: #{mlp_ensemble_forward.1} parent=0 // pred_check
    _
  $region31: #{mlp_ensemble_forward.1} parent=0 // pred_check_branch
    %378 = sbr.rel (0) target = $region33
  $region32: #{mlp_ensemble_forward.1} parent=0 // pred_region
    _
  $region33: #{mlp_ensemble_forward.1} parent=0 // pred_fallthru
    _

</llo_original>
